<compile_context>
chip_gen: v5e
topology: v5e:2x2
jax: 0.10.0
libtpu: 0.0.40
codegen_flags: <defaults>
</compile_context>

<pallas_src>
import functools
from math import sqrt

import jax
import jax.numpy as jnp
from jax import lax
from jax.experimental import pallas as pl
from jax.experimental.pallas import tpu as pltpu


def _round_up(x, m):
    return ((x + m - 1) // m) * m


def _general_scorer_kernel(q_ref, w_ref, k_ref, o_ref, qw_ref, *, inv_scale):
    # q_ref: (tT, M), w_ref: (M, N), k_ref: (tS, N), o_ref: (tT, tS)
    # qw_ref: (tT, N) f32 scratch, persistent across the innermost S axis.
    @pl.when(pl.program_id(2) == 0)
    def _():
        qw = jnp.dot(q_ref[...], w_ref[...], preferred_element_type=jnp.float32)
        qw_ref[...] = qw * inv_scale  # scale the small (tT, N) tile, not (tT, tS)

    # Contract over N = last dim of BOTH operands (attention QK^T pattern);
    # MXU consumes keys in their natural (S, N) layout -- no transpose pass.
    scores = lax.dot_general(
        qw_ref[...].astype(k_ref.dtype), k_ref[...],
        dimension_numbers=(((1,), (1,)), ((), ())),
        preferred_element_type=jnp.float32,
    )
    o_ref[...] = scores.astype(o_ref.dtype)


def general_scorer(query, keys, W, scaled=True, *, t_tile=256, s_tile=512):
    """query: (B, ..., T, M), keys: (B, ..., S, N), W: (M, N) -> (B, ..., T, S)."""
    *lead_q, T, M = query.shape
    *lead_k, S, N = keys.shape
    assert tuple(lead_q) == tuple(lead_k), "query/keys leading dims must match"
    assert W.shape == (M, N)

    Bf = 1
    for d in lead_q:
        Bf *= int(d)

    q = query.reshape(Bf, T, M)
    k = keys.reshape(Bf, S, N)  # natural layout; no HBM transpose pass

    inv_scale = 1.0 / (sqrt(max(M, N)) if scaled else 1.0)

    # Sublane-aligned T tiles, lane-dense (multiple-of-128) S tiles so output
    # stores are unmasked full-lane vst.
    tT = min(t_tile, _round_up(T, 8))
    tS = min(s_tile, _round_up(S, 128))
    Tp = _round_up(T, tT)
    Sp = _round_up(S, tS)

    if Tp != T:
        q = jnp.pad(q, ((0, 0), (0, Tp - T), (0, 0)))
    if Sp != S:
        k = jnp.pad(k, ((0, 0), (0, Sp - S), (0, 0)))

    grid = (Bf, Tp // tT, Sp // tS)
    kernel = functools.partial(_general_scorer_kernel, inv_scale=inv_scale)

    itemsize = query.dtype.itemsize
    n_t_tiles = Tp // tT
    cost = pl.CostEstimate(
        flops=2 * Bf * Tp * M * N + 2 * Bf * Tp * Sp * N,
        transcendentals=0,
        bytes_accessed=(q.size + n_t_tiles * k.size + W.size + Bf * Tp * Sp)
        * itemsize,
    )

    out = pl.pallas_call(
        kernel,
        out_shape=jax.ShapeDtypeStruct((Bf, Tp, Sp), query.dtype),
        grid_spec=pltpu.PrefetchScalarGridSpec(
            num_scalar_prefetch=0,
            grid=grid,
            in_specs=[
                pl.BlockSpec((None, tT, M), lambda b, i, j: (b, i, 0)),  # query tile
                pl.BlockSpec((M, N), lambda b, i, j: (0, 0)),            # W (resident)
                pl.BlockSpec((None, tS, N), lambda b, i, j: (b, j, 0)),  # keys tile
            ],
            out_specs=pl.BlockSpec((None, tT, tS), lambda b, i, j: (b, i, j)),
            scratch_shapes=[pltpu.VMEM((tT, N), jnp.float32)],
        ),
        compiler_params=pltpu.CompilerParams(
            dimension_semantics=("parallel", "parallel", "arbitrary"),
        ),
        cost_estimate=cost,
    )(q, W, k)

    out = out[:, :T, :S]
    return out.reshape(*lead_q, T, S)


if __name__ == "__main__":
    # Small shapes consistent with the module's forward:
    # batch=2, target_len=8, source_len=8, query_size=32, key_size=32
    B, T, S, M, N = 2, 8, 8, 32, 32

    key = jax.random.PRNGKey(0)
    kq, kk, kw = jax.random.split(key, 3)
    query = jax.random.normal(kq, (B, T, M), dtype=jnp.float32)
    keys = jax.random.normal(kk, (B, S, N), dtype=jnp.float32)
    # Deterministic stand-in for nn.Parameter(torch.randn(query_size, key_size))
    W = jax.random.normal(kw, (M, N), dtype=jnp.float32)

    out = general_scorer(query, keys, W, scaled=True)
    out = jax.block_until_ready(out)

    # Reference check against plain-JAX einsum.
    ref = jnp.einsum("btm,mn,bsn->bts", query, W, keys) / sqrt(max(M, N))
    assert out.shape == (B, T, S)
    assert jnp.allclose(out, ref, atol=1e-4, rtol=1e-4)

    print("KERNEL_OK")
</pallas_src>

<mosaic_0001>
module attributes {stable_mosaic.version = 11 : i64} {
  func.func @_general_scorer_kernel(%arg0: i32, %arg1: i32, %arg2: i32, %arg3: memref<1x8x32xf32, #tpu.memory_space<vmem>>, %arg4: memref<32x32xf32, #tpu.memory_space<vmem>>, %arg5: memref<1x128x32xf32, #tpu.memory_space<vmem>>, %arg6: memref<1x8x128xf32, #tpu.memory_space<vmem>>, %arg7: memref<8x32xf32, #tpu.memory_space<vmem>>) attributes {dimension_semantics = [#tpu.dimension_semantics<parallel>, #tpu.dimension_semantics<parallel>, #tpu.dimension_semantics<arbitrary>], iteration_bounds = array<i64: 2, 1, 1>, scalar_prefetch = 0 : i64, scratch_operands = 1 : i64, tpu.core_type = #tpu.core_type<tc>, window_params = [{transform_indices = @transform_0, window_bounds = array<i64: 1, 8, 32>}, {pipeline_mode = #tpu.pipeline_mode<synchronous>, transform_indices = @transform_1, window_bounds = array<i64: 32, 32>}, {transform_indices = @transform_2, window_bounds = array<i64: 1, 128, 32>}, {transform_indices = @transform_3, window_bounds = array<i64: 1, 8, 128>}]} {
    %c0_i32 = arith.constant 0 : i32
    %0 = arith.cmpi eq, %arg2, %c0_i32 : i32
    %1 = arith.extui %0 : i1 to i32
    %c0_i32_0 = arith.constant 0 : i32
    %2 = arith.cmpi ne, %1, %c0_i32_0 : i32
    scf.if %2 {
      %c0_8 = arith.constant 0 : index
      %c0_9 = arith.constant 0 : index
      %c0_10 = arith.constant 0 : index
      %10 = vector.load %arg3[%c0_8, %c0_9, %c0_10] : memref<1x8x32xf32, #tpu.memory_space<vmem>>, vector<1x8x32xf32>
      %11 = vector.shape_cast %10 : vector<1x8x32xf32> to vector<8x32xf32>
      %c0_11 = arith.constant 0 : index
      %c0_12 = arith.constant 0 : index
      %12 = vector.load %arg4[%c0_11, %c0_12] : memref<32x32xf32, #tpu.memory_space<vmem>>, vector<32x32xf32>
      %cst_13 = arith.constant dense<0.000000e+00> : vector<8x32xf32>
      %13 = tpu.matmul %11, %12, %cst_13 {dimension_numbers = #tpu.dot_dimension_numbers<[1], [0], [0], [1], [0, 0, 1, 1], [], []>} : vector<8x32xf32>, vector<32x32xf32>, vector<8x32xf32> -> vector<8x32xf32>
      %cst_14 = arith.constant 0.176776692 : f32
      %14 = vector.broadcast %cst_14 : f32 to vector<8x32xf32>
      %15 = arith.mulf %13, %14 : vector<8x32xf32>
      %c0_15 = arith.constant 0 : index
      %c0_16 = arith.constant 0 : index
      %16 = vector.load %arg7[%c0_15, %c0_16] : memref<8x32xf32, #tpu.memory_space<vmem>>, vector<8x32xf32>
      tpu.vector_store %arg7[%c0_15, %c0_16], %15 {strides = array<i32>} : memref<8x32xf32, #tpu.memory_space<vmem>>, vector<8x32xf32>,
    } else {
    }
    %c0 = arith.constant 0 : index
    %c0_1 = arith.constant 0 : index
    %3 = vector.load %arg7[%c0, %c0_1] : memref<8x32xf32, #tpu.memory_space<vmem>>, vector<8x32xf32>
    %c0_2 = arith.constant 0 : index
    %c0_3 = arith.constant 0 : index
    %c0_4 = arith.constant 0 : index
    %4 = vector.load %arg5[%c0_2, %c0_3, %c0_4] : memref<1x128x32xf32, #tpu.memory_space<vmem>>, vector<1x128x32xf32>
    %5 = vector.shape_cast %4 : vector<1x128x32xf32> to vector<128x32xf32>
    %cst = arith.constant dense<0.000000e+00> : vector<8x128xf32>
    %6 = tpu.matmul %3, %5, %cst {dimension_numbers = #tpu.dot_dimension_numbers<[1], [1], [0], [0], [0, 0, 1, 0], [], []>} : vector<8x32xf32>, vector<128x32xf32>, vector<8x128xf32> -> vector<8x128xf32>
    %c0_5 = arith.constant 0 : index
    %c0_6 = arith.constant 0 : index
    %c0_7 = arith.constant 0 : index
    %7 = vector.load %arg6[%c0_5, %c0_6, %c0_7] : memref<1x8x128xf32, #tpu.memory_space<vmem>>, vector<1x8x128xf32>
    %8 = vector.shape_cast %7 : vector<1x8x128xf32> to vector<8x128xf32>
    %9 = vector.shape_cast %6 : vector<8x128xf32> to vector<1x8x128xf32>
    tpu.vector_store %arg6[%c0_5, %c0_6, %c0_7], %9 {strides = array<i32>} : memref<1x8x128xf32, #tpu.memory_space<vmem>>, vector<1x8x128xf32>,
    return
  }
  func.func @transform_0(%arg0: i32, %arg1: i32, %arg2: i32) -> (i32, i32, i32) {
    %c0_i32 = arith.constant 0 : i32
    %c0_i32_0 = arith.constant 0 : i32
    return %arg0, %arg1, %c0_i32 : i32, i32, i32
  }
  func.func @transform_1(%arg0: i32, %arg1: i32, %arg2: i32) -> (i32, i32) {
    %c0_i32 = arith.constant 0 : i32
    %c0_i32_0 = arith.constant 0 : i32
    %c0_i32_1 = arith.constant 0 : i32
    return %c0_i32, %c0_i32_0 : i32, i32
  }
  func.func @transform_2(%arg0: i32, %arg1: i32, %arg2: i32) -> (i32, i32, i32) {
    %c0_i32 = arith.constant 0 : i32
    %c0_i32_0 = arith.constant 0 : i32
    return %arg0, %arg2, %c0_i32 : i32, i32, i32
  }
  func.func @transform_3(%arg0: i32, %arg1: i32, %arg2: i32) -> (i32, i32, i32) {
    %c0_i32 = arith.constant 0 : i32
    return %arg0, %arg1, %arg2 : i32, i32, i32
  }
}

</mosaic_0001>

<llo_original>
// kernel: tpu_custom_call.1
$region0: #{tpu_custom_call.1}
  #allocation0 [shape = 'u32[]', space=smem, size = 0x4, offset = 0x4, fixed_abs, tag = 'smem constant byte address 0x4 - core index']
  #allocation1 [shape = 'u32[72,128]{1,0:T(1,128)}', space=vmem, size = 0x9000, scoped, tag = 'internal scratch']
  #allocation2 [shape = 'f32[8,32]{1,0:T(8,128)}', space=vmem, size = 0x1000, scoped, tag = 'scratch operand']
  %s0 = inlined_call_operand.vmem [shape: f32[2,8,32], index: 0, kind: input, shape index: {}]
  %s1 = inlined_call_operand.vmem [shape: f32[32,32], index: 1, kind: input, shape index: {}]
  %s2 = inlined_call_operand.vmem [shape: f32[2,128,32], index: 2, kind: input, shape index: {}]
  %s3 = inlined_call_operand.hbm [shape: f32[2,8,128], index: 3, kind: output, shape index: {}]
  %s4 = sld [smem:[#allocation0]]
  $region49: #{tpu_custom_call.1} parent=0
    _
  %s6 = ssub.s32 1, %s4
  %s7 = scalar_select 0, %s6, %s4
  $region1: #{tpu_custom_call.1} parent=0
    #allocation3 [shape = 'u8[8192]{0}', space=vmem, size = 0x2000, scoped, tag = 'output window, operand 0']
    #allocation4 [shape = 's32[2]{0}', space=sflag, size = 0x8, scoped, tag = 'scoped memory for tpu_custom_call.1']
    %8 = vsyncpa [#allocation4], 0
    %s9 = scalar_lea.sflag [#allocation4], 1
    %10 = vsyncpa %s9, 0
    loop: start=0, step=1, limit=4
    $region2: #{tpu_custom_call.1} parent=1 // loop_pre_header
      _
    $region3: #{tpu_custom_call.1} parent=1 // loop_header
      %s12 = sphi 0, %s16
      %p13 = scmp.ge.s32.totalorder %s12, 4
      %s19 = sphi 0, %s38
      %s20 = sphi 0, %s34
      %s21 = sphi 0, %s30
      %s22 = sphi 0, %s19
      %s23 = sphi 0, %s20
      %s24 = sphi 0, %s21
      %s25 = sphi 0, %s22
      %s26 = sphi 0, %s23
      %s27 = sphi 0, %s24
      %s43 = sphi 0, %s45
      %s46 = sphi 0, %s43
      %s47 = sphi 0, %s46
      %s63 = sphi 0, %s47
      %s67 = sphi 0, %s67
      %s69 = sphi 0, %s67
      %s70 = sphi 0, %s69
      %s84 = sphi 0, %s70
      %s92 = sphi 0, %s94
      %s95 = sphi 0, %s92
      %s96 = sphi 0, %s95
      %s112 = sphi 0, %s96
      %s122 = sphi 0, %s124
      %s125 = sphi 0, %s122
      %s126 = sphi 0, %s125
      %s142 = sphi 0, %s126
    $region4: #{tpu_custom_call.1} parent=1 // loop_header_branch
      %15 = sbr.rel (%p13) target = $region8
    $region5: #{tpu_custom_call.1} parent=1 // loop_body
      %s17 = ssub.s32 %s12, 1
      %s18 = ssub.s32 %s12, 2
      %s28 = sadd.s32 1, %s21
      %p29 = scmp.ge.s32.totalorder %s28, 1
      %s30 = scalar_select %p29, 0, %s28
      %s31 = sadd.s32 1, %s20
      %s32 = scalar_select %p29, %s31, %s20
      %p33 = scmp.ge.s32.totalorder %s32, 1
      %s34 = scalar_select %p33, 0, %s32
      %s35 = sadd.s32 1, %s19
      %s36 = scalar_select %p33, %s35, %s19
      %p37 = scmp.ge.s32.totalorder %s36, 2
      %s38 = scalar_select %p37, 0, %s36
      %s39 = ssub.s32 %s19, %s38
      %s40 = ssub.s32 %s20, %s34
      %s41 = sor.u32 %s39, %s40
      %p42 = scmp.eq.s32.totalorder %s41, 0
      %s44 = sadd.s32 %s43, 1
      %s45 = scalar_select %p42, %s43, %s44
      %p48 = pneg %p42
      %p49 = scmp.eq.s32.totalorder %s12, 1
      %p50 = por %p48, %p49
      %p51 = scmp.ne.s32.totalorder %s43, %s46
      %p52 = scmp.eq.s32.totalorder %s12, 0
      %p53 = por %p51, %p52
      %p54 = scmp.ne.s32.totalorder %s43, %s46
      %p55 = scmp.eq.s32.totalorder %s17, 1
      %p56 = por %p54, %p55
      %p57 = scmp.ne.s32.totalorder %s46, %s47
      %p58 = scmp.eq.s32.totalorder %s17, 0
      %p59 = por %p57, %p58
      %p60 = scmp.ne.s32.totalorder %s46, %s47
      %p61 = scmp.eq.s32.totalorder %s18, 1
      %p62 = por %p60, %p61
      %p64 = scmp.ne.s32.totalorder %s47, %s63
      %p65 = scmp.eq.s32.totalorder %s18, 0
      %p66 = por %p64, %p65
      %s68 = sadd.s32 %s67, 1
      %p71 = scmp.eq.s32.totalorder %s12, 1
      %p72 = scmp.ne.s32.totalorder %s67, %s69
      %p73 = scmp.eq.s32.totalorder %s12, 0
      %p74 = por %p72, %p73
      %p75 = scmp.ne.s32.totalorder %s67, %s69
      %p76 = scmp.eq.s32.totalorder %s17, 1
      %p77 = por %p75, %p76
      %p78 = scmp.ne.s32.totalorder %s69, %s70
      %p79 = scmp.eq.s32.totalorder %s17, 0
      %p80 = por %p78, %p79
      %p81 = scmp.ne.s32.totalorder %s69, %s70
      %p82 = scmp.eq.s32.totalorder %s18, 1
      %p83 = por %p81, %p82
      %p85 = scmp.ne.s32.totalorder %s70, %s84
      %p86 = scmp.eq.s32.totalorder %s18, 0
      %p87 = por %p85, %p86
      %s88 = ssub.s32 %s19, %s38
      %s89 = ssub.s32 %s21, %s30
      %s90 = sor.u32 %s88, %s89
      %p91 = scmp.eq.s32.totalorder %s90, 0
      %s93 = sadd.s32 %s92, 1
      %s94 = scalar_select %p91, %s92, %s93
      %p97 = pneg %p91
      %p98 = scmp.eq.s32.totalorder %s12, 1
      %p99 = por %p97, %p98
      %p100 = scmp.ne.s32.totalorder %s92, %s95
      %p101 = scmp.eq.s32.totalorder %s12, 0
      %p102 = por %p100, %p101
      %p103 = scmp.ne.s32.totalorder %s92, %s95
      %p104 = scmp.eq.s32.totalorder %s17, 1
      %p105 = por %p103, %p104
      %p106 = scmp.ne.s32.totalorder %s95, %s96
      %p107 = scmp.eq.s32.totalorder %s17, 0
      %p108 = por %p106, %p107
      %p109 = scmp.ne.s32.totalorder %s95, %s96
      %p110 = scmp.eq.s32.totalorder %s18, 1
      %p111 = por %p109, %p110
      %p113 = scmp.ne.s32.totalorder %s96, %s112
      %p114 = scmp.eq.s32.totalorder %s18, 0
      %p115 = por %p113, %p114
      %s116 = ssub.s32 %s19, %s38
      %s117 = ssub.s32 %s20, %s34
      %s118 = sor.u32 %s116, %s117
      %s119 = ssub.s32 %s21, %s30
      %s120 = sor.u32 %s118, %s119
      %p121 = scmp.eq.s32.totalorder %s120, 0
      %s123 = sadd.s32 %s122, 1
      %s124 = scalar_select %p121, %s122, %s123
      %p127 = pneg %p121
      %p128 = scmp.eq.s32.totalorder %s12, 1
      %p129 = por %p127, %p128
      %p130 = scmp.ne.s32.totalorder %s122, %s125
      %p131 = scmp.eq.s32.totalorder %s12, 0
      %p132 = por %p130, %p131
      %p133 = scmp.ne.s32.totalorder %s122, %s125
      %p134 = scmp.eq.s32.totalorder %s17, 1
      %p135 = por %p133, %p134
      %p136 = scmp.ne.s32.totalorder %s125, %s126
      %p137 = scmp.eq.s32.totalorder %s17, 0
      %p138 = por %p136, %p137
      %p139 = scmp.ne.s32.totalorder %s125, %s126
      %p140 = scmp.eq.s32.totalorder %s18, 1
      %p141 = por %p139, %p140
      %p143 = scmp.ne.s32.totalorder %s126, %s142
      %p144 = scmp.eq.s32.totalorder %s18, 0
      %p145 = por %p143, %p144
      %p146 = scmp.le.s32.totalorder 1, %s12
      %p147 = scmp.lt.s32.totalorder %s12, 3
      %p148 = pnand %p146, %p147
      %p149 = pneg %p148
      // Predicated region
      $region9: #{tpu_custom_call.1} parent=5 // pred_check
        _
      $region10: #{tpu_custom_call.1} parent=5 // pred_check_branch
        %151 = sbr.rel (%p148) target = $region12
      $region11: #{tpu_custom_call.1} parent=5 // pred_region
        %s152 = ssub.s32 %s12, 1
        // Predicated region
        $region13: #{tpu_custom_call.1} parent=11 // pred_check
          %p153 = pneg %p80
        $region14: #{tpu_custom_call.1} parent=11 // pred_check_branch
          %155 = sbr.rel (%p153) target = $region16
        $region15: #{tpu_custom_call.1} parent=11 // pred_region
          _
        $region16: #{tpu_custom_call.1} parent=11 // pred_fallthru
          _
      $region12: #{tpu_custom_call.1} parent=5 // pred_fallthru
        _
      %p156 = scmp.lt.s32.totalorder %s12, 2
      // Predicated region
      $region17: #{tpu_custom_call.1} parent=5 // pred_check
        %p157 = pneg %p156
      $region18: #{tpu_custom_call.1} parent=5 // pred_check_branch
        %159 = sbr.rel (%p157) target = $region20
      $region19: #{tpu_custom_call.1} parent=5 // pred_region
        // Predicated region
        $region21: #{tpu_custom_call.1} parent=19 // pred_check
          %p160 = pneg %p53
        $region22: #{tpu_custom_call.1} parent=19 // pred_check_branch
          %162 = sbr.rel (%p160) target = $region24
        $region23: #{tpu_custom_call.1} parent=19 // pred_region
          %p163 = scmp.lt.s32.totalorder %s19, 1
          %s164 = scalar_select %p163, %s19, 1
          %p165 = scmp.lt.s32.totalorder %s20, 0
          %s166 = scalar_select %p165, %s20, 0
          %s167 = sadd.s32 %s166, %s164
          %s168 = smul.addr %s167, 8
          %s169 = scalar_lea.vmem %s0, %s168
        $region24: #{tpu_custom_call.1} parent=19 // pred_fallthru
          _
        // Predicated region
        $region25: #{tpu_custom_call.1} parent=19 // pred_check
          %p170 = pneg %p102
        $region26: #{tpu_custom_call.1} parent=19 // pred_check_branch
          %172 = sbr.rel (%p170) target = $region28
        $region27: #{tpu_custom_call.1} parent=19 // pred_region
          %s173 = smul.u32 16, %s21
          %p174 = scmp.lt.s32.totalorder %s19, 1
          %s175 = scalar_select %p174, %s19, 1
          %p176 = scmp.lt.s32.totalorder %s173, 15
          %s177 = scalar_select %p176, %s173, 15
          %s178 = smul.addr %s175, 16
          %s179 = sadd.s32 %s177, %s178
          %s180 = smul.addr %s179, 8
          %s181 = scalar_lea.vmem %s2, %s180
          %s182 = smul.u32 16, %s21
        $region28: #{tpu_custom_call.1} parent=19 // pred_fallthru
          _
      $region20: #{tpu_custom_call.1} parent=5 // pred_fallthru
        _
      %p183 = scmp.le.s32.totalorder 1, %s12
      %p184 = scmp.lt.s32.totalorder %s12, 3
      %p185 = pnand %p183, %p184
      %p186 = pneg %p185
      // Predicated region
      $region29: #{tpu_custom_call.1} parent=5 // pred_check
        _
      $region30: #{tpu_custom_call.1} parent=5 // pred_check_branch
        %188 = sbr.rel (%p185) target = $region32
      $region31: #{tpu_custom_call.1} parent=5 // pred_region
        %s189 = ssub.s32 %s12, 1
        %p190 = scmp.lt.s32.totalorder %s22, 1
        %s191 = scalar_select %p190, %s22, 1
        %p192 = scmp.lt.s32.totalorder %s23, 0
        %s193 = scalar_select %p192, %s23, 0
        %s194 = sadd.s32 %s193, %s191
        %s195 = smul.addr %s194, 8
        %s196 = scalar_lea.vmem %s0, %s195
        %p197 = pneg %p59
        %p198 = pneg %p56
        %p199 = pneg %p80
        %p200 = pneg %p77
        %s201 = smul.u32 16, %s24
        %p202 = scmp.lt.s32.totalorder %s22, 1
        %s203 = scalar_select %p202, %s22, 1
        %p204 = scmp.lt.s32.totalorder %s201, 15
        %s205 = scalar_select %p204, %s201, 15
        %s206 = smul.addr %s203, 16
        %s207 = sadd.s32 %s205, %s206
        %s208 = smul.addr %s207, 8
        %s209 = scalar_lea.vmem %s2, %s208
        %p210 = pneg %p108
        %p211 = pneg %p105
        %p212 = pneg %p138
        %p213 = pneg %p135
        %s214 = sand.u32 %s125, 1
        %s215 = scalar_lea.sflag [#allocation4], %s214
        %s216 = sand.u32 %s125, 1
        %s217 = smul.addr %s216, 8
        %s218 = scalar_lea.vmem [#allocation3], %s217
        %p219 = scmp.lt.s32.totalorder %s22, 1
        %s220 = scalar_select %p219, %s22, 1
        %p221 = scmp.lt.s32.totalorder %s23, 0
        %s222 = scalar_select %p221, %s23, 0
        %s223 = sadd.s32 %s222, %s220
        %s224 = smul.addr %s223, 8
        %s225 = scalar_lea.vmem %s0, %s224
        %s226 = smul.u32 16, %s24
        %p227 = scmp.lt.s32.totalorder %s22, 1
        %s228 = scalar_select %p227, %s22, 1
        %p229 = scmp.lt.s32.totalorder %s226, 15
        %s230 = scalar_select %p229, %s226, 15
        %s231 = smul.addr %s228, 16
        %s232 = sadd.s32 %s230, %s231
        %s233 = smul.addr %s232, 8
        %s234 = scalar_lea.vmem %s2, %s233
        %s235 = smul.u32 16, %s24
        %p236 = scmp.eq.s32.totalorder %s24, 0
        // Predicated region
        $region33: #{tpu_custom_call.1} parent=31 // pred_check
          %p237 = pneg %p236
        $region34: #{tpu_custom_call.1} parent=31 // pred_check_branch
          %239 = sbr.rel (%p237) target = $region36
        $region35: #{tpu_custom_call.1} parent=31 // pred_region
          %v240 = vld [vmem:[%s225] sm:$0xff]
          %v241 = vld [vmem:[%s1] sm:$0xff]
          %v242 = vld [vmem:[%s1 + $0x8] sm:$0xff]
          %v243 = vld [vmem:[%s1 + $0x10] sm:$0xff]
          %v244 = vld [vmem:[%s1 + $0x18] sm:$0xff]
          %vm245 = vcmask 261120
          %v247 = vsel %vm245, %v240, 0
          %249 = vmatpush.msra.mxu0 0.0
          %250 = vmatpush.msra.mxu0 0.0
          %251 = vmatpush.msra.mxu0 0.0
          %252 = vmatpush.msra.mxu0 0.0
          %253 = vmatpush.msra.mxu0 0.0
          %254 = vmatpush.msra.mxu0 0.0
          %255 = vmatpush.msra.mxu0 0.0
          %256 = vmatpush.msra.mxu0 0.0
          %257 = vmatpush.msra.mxu0 0.0
          %258 = vmatpush.msra.mxu0 0.0
          %259 = vmatpush.msra.mxu0 0.0
          %260 = vmatpush.msra.mxu0 0.0
          %261 = vmatpush.msra.mxu0 %v244
          %262 = vmatpush.msra.mxu0 %v243
          %263 = vmatpush.msra.mxu0 %v242
          %264 = vmatpush.msra.mxu0 %v241
          %265 = vmatmul.f32.gmra.mxu0 %v247
          %v266 = vpop.f32.mrf.mxu0
          %v267 = vadd.f32 0.0, %v266
          %268 = vdwg.mxu0
          %v269 = vmul.f32 %v267, 0.17677669
          %270 = vst.msk [vmem:[#allocation2] sm:$0xff] %vm245, %v269
        $region36: #{tpu_custom_call.1} parent=31 // pred_fallthru
          _
        %v271 = vld [vmem:[#allocation2] sm:$0xff]
        %v272 = vld [vmem:[%s234] sm:$0xff]
        %v273 = vld [vmem:[%s234 + $0x8] sm:$0xff]
        %v274 = vld [vmem:[%s234 + $0x10] sm:$0xff]
        %v275 = vld [vmem:[%s234 + $0x18] sm:$0xff]
        %v276 = vld [vmem:[%s234 + $0x20] sm:$0xff]
        %v277 = vld [vmem:[%s234 + $0x28] sm:$0xff]
        %v278 = vld [vmem:[%s234 + $0x30] sm:$0xff]
        %v279 = vld [vmem:[%s234 + $0x38] sm:$0xff]
        %v280 = vld [vmem:[%s234 + $0x40] sm:$0xff]
        %v281 = vld [vmem:[%s234 + $0x48] sm:$0xff]
        %v282 = vld [vmem:[%s234 + $0x50] sm:$0xff]
        %v283 = vld [vmem:[%s234 + $0x58] sm:$0xff]
        %v284 = vld [vmem:[%s234 + $0x60] sm:$0xff]
        %v285 = vld [vmem:[%s234 + $0x68] sm:$0xff]
        %v286 = vld [vmem:[%s234 + $0x70] sm:$0xff]
        %v287 = vld [vmem:[%s234 + $0x78] sm:$0xff]
        %vm288 = vcmask 261120
        %v290 = vsel %vm288, %v271, 0
        %v293 = vsel %vm288, %v272, 0
        %v296 = vsel %vm288, %v273, 0
        %v299 = vsel %vm288, %v274, 0
        %v302 = vsel %vm288, %v275, 0
        %v305 = vsel %vm288, %v276, 0
        %v308 = vsel %vm288, %v277, 0
        %v311 = vsel %vm288, %v278, 0
        %v314 = vsel %vm288, %v279, 0
        %v317 = vsel %vm288, %v280, 0
        %v320 = vsel %vm288, %v281, 0
        %v323 = vsel %vm288, %v282, 0
        %v326 = vsel %vm288, %v283, 0
        %v329 = vsel %vm288, %v284, 0
        %v332 = vsel %vm288, %v285, 0
        %v335 = vsel %vm288, %v286, 0
        %v338 = vsel %vm288, %v287, 0
        %340 = vmatpush.xpose.msra.mxu0 %v338
        %341 = vmatpush.xpose.msra.mxu0 %v335
        %342 = vmatpush.xpose.msra.mxu0 %v332
        %343 = vmatpush.xpose.msra.mxu0 %v329
        %344 = vmatpush.xpose.msra.mxu0 %v326
        %345 = vmatpush.xpose.msra.mxu0 %v323
        %346 = vmatpush.xpose.msra.mxu0 %v320
        %347 = vmatpush.xpose.msra.mxu0 %v317
        %348 = vmatpush.xpose.msra.mxu0 %v314
        %349 = vmatpush.xpose.msra.mxu0 %v311
        %350 = vmatpush.xpose.msra.mxu0 %v308
        %351 = vmatpush.xpose.msra.mxu0 %v305
        %352 = vmatpush.xpose.msra.mxu0 %v302
        %353 = vmatpush.xpose.msra.mxu0 %v299
        %354 = vmatpush.xpose.msra.mxu0 %v296
        %355 = vmatpush.xpose.msra.mxu0 %v293
        %356 = vmatmul.f32.gmra.mxu0 %v290
        %v357 = vpop.f32.mrf.mxu0
        %v358 = vadd.f32 0.0, %v357
        %359 = vdwg.mxu0
        %360 = vst [vmem:[%s218] sm:$0xff] %v358
        %s361 = sand.u32 %s125, 1
        %s362 = scalar_lea.sflag [#allocation4], %s361
        %s363 = sand.u32 %s125, 1
        %s364 = smul.addr %s363, 8
        %s365 = scalar_lea.vmem [#allocation3], %s364
        // Predicated region
        $region37: #{tpu_custom_call.1} parent=31 // pred_check
          %p366 = pneg %p135
        $region38: #{tpu_custom_call.1} parent=31 // pred_check_branch
          %368 = sbr.rel (%p366) target = $region40
        $region39: #{tpu_custom_call.1} parent=31 // pred_region
          %370 = vsyncadd %s362, 0
          %s371 = sadd.s32 %s24, %s23
          %s372 = sadd.s32 %s371, %s22
          %s373 = smul.addr %s372, 8
          %s374 = scalar_lea.hbm %s3, %s373
          %s376 = sshll.u32 %s365, 4
          %s377 = int_to_ptr.vmem [resolvable:$true] %s376
          %s378 = sshll.u32 %s374, 4
          %s379 = int_to_ptr.hbm [resolvable:$true] %s378
          %381 = dma.vmem_to_hbm [thread:$0]  %s377, 128, %s379, %s362
        $region40: #{tpu_custom_call.1} parent=31 // pred_fallthru
          _
      $region32: #{tpu_custom_call.1} parent=5 // pred_fallthru
        _
      %p382 = scmp.le.s32.totalorder 2, %s12
      // Predicated region
      $region41: #{tpu_custom_call.1} parent=5 // pred_check
        %p383 = pneg %p382
      $region42: #{tpu_custom_call.1} parent=5 // pred_check_branch
        %385 = sbr.rel (%p383) target = $region44
      $region43: #{tpu_custom_call.1} parent=5 // pred_region
        %s386 = ssub.s32 %s12, 2
        // Predicated region
        $region45: #{tpu_custom_call.1} parent=43 // pred_check
          %p387 = pneg %p141
        $region46: #{tpu_custom_call.1} parent=43 // pred_check_branch
          %389 = sbr.rel (%p387) target = $region48
        $region47: #{tpu_custom_call.1} parent=43 // pred_region
          %s390 = sand.u32 %s126, 1
          %s391 = scalar_lea.sflag [#allocation4], %s390
          %s392 = sand.u32 %s126, 1
          %s393 = smul.addr %s392, 8
          %s394 = scalar_lea.vmem [#allocation3], %s393
          %396 = dma.done %s391, 128
        $region48: #{tpu_custom_call.1} parent=43 // pred_fallthru
          _
      $region44: #{tpu_custom_call.1} parent=5 // pred_fallthru
        _
    $region6: #{tpu_custom_call.1} parent=1 // loop_footer
      %s16 = sadd.s32 1, %s12
    $region7: #{tpu_custom_call.1} parent=1 // loop_footer_branch
      %11 = sbr.rel target = $region3
    $region8: #{tpu_custom_call.1} parent=1 // loop_exit
      _
    %397 = vsyncpa [#allocation4], 1
    %s398 = scalar_lea.sflag [#allocation4], 1
    %399 = vsyncpa %s398, 1

</llo_original>
